<compile_context>
chip_gen: v7x
topology: tpu7x:2x2x1
jax: 0.10.0
libtpu: 0.0.40
codegen_flags: <defaults>
</compile_context>

<pallas_src>
import jax
import jax.numpy as jnp
from jax import lax
from jax.experimental import pallas as pl
from jax.experimental.pallas import tpu as pltpu  # noqa: F401  (not needed at this size)

# ---- model dimensions (small, consistent with the module) ----
B, S, D = 2, 8, 32        # batch, sequence length, d_model (== EncoderLayer.size)
H = 4                     # attention heads
DH = D // H               # head dim
DFF = 64                  # feed-forward hidden dim
EPS = 1e-6                # LayerNorm eps
R = B * S                 # flattened row count
C = H * R                 # expanded (head, batch, key) column count


def _block_eq(shape, row_blk, col_blk):
    # (i // row_blk == j // col_blk) as f32, built from iota + float floor
    # (avoids vector integer division).
    ri = lax.broadcasted_iota(jnp.int32, shape, 0).astype(jnp.float32)
    ci = lax.broadcasted_iota(jnp.int32, shape, 1).astype(jnp.float32)
    return (jnp.floor(ri * (1.0 / row_blk)) ==
            jnp.floor(ci * (1.0 / col_blk))).astype(jnp.float32)


def _layer_norm(x, a, b):
    # torch custom LayerNorm: mean over last dim; unbiased std (N-1); eps on std.
    mean = jnp.mean(x, axis=-1, keepdims=True)
    xc = x - mean
    var = jnp.sum(xc * xc, axis=-1, keepdims=True) * (1.0 / (x.shape[-1] - 1))
    inv = pl.reciprocal(jnp.sqrt(var) + EPS, approx=True)
    return a * xc * inv + b


def encoder_layer_kernel(x_ref, bias_ref, w_ref, w2_ref, vec_ref, out_ref):
    x = x_ref[...]                                   # (R, D)

    vecs = vec_ref[...]                              # (8, 3D) packed small vectors
    ln1a, ln1b = vecs[0:1, :D], vecs[1:2, :D]
    ln2a, ln2b = vecs[2:3, :D], vecs[3:4, :D]
    bo, b2 = vecs[4:5, :D], vecs[5:6, :D]
    b1 = vecs[6:7, :DFF]
    bqkv = vecs[7:8, :]                              # (1, 3D)

    wqkv = w_ref[:, 0:3 * D]                         # (D, 3D) (1/sqrt(DH) folded into Wq)
    wo = w_ref[:, 3 * D:4 * D]                       # (D, D)
    w1 = w_ref[:, 4 * D:4 * D + DFF]                 # (D, DFF)

    # ---------- sublayer 0: x + self_attn(LN1(x)) ----------
    xn = _layer_norm(x, ln1a, ln1b)
    qkv = jnp.dot(xn, wqkv, preferred_element_type=jnp.float32) + bqkv   # (R, 3D)
    q = qkv[:, 0:D]
    k = qkv[:, D:2 * D]
    v = qkv[:, 2 * D:3 * D]

    # Replicate K/V once per head and zero columns outside that head:
    #   khat[h*R + r, d] = k[r, d] * (d in head h)
    # Built with a broadcast + leading-dim merge (layout-preserving) and an
    # iota block mask — no per-head slices, no transposes.
    head_sel = _block_eq((C, D), R, DH)              # (C, D)
    khat = jnp.broadcast_to(k[None], (H, R, D)).reshape(C, D) * head_sel
    vhat = jnp.broadcast_to(v[None], (H, R, D)).reshape(C, D) * head_sel

    # All heads' logits in one MXU matmul (NT form, as in flash attention):
    #   scores[r, h*R + r'] = q_h[r] . k_h[r']
    scores = lax.dot_general(q, khat, (((1,), (1,)), ((), ())),
                             preferred_element_type=jnp.float32)          # (R, C)
    scores = scores + bias_ref[...]      # additive mask: masked keys & cross-batch

    # Per-(row, head) softmax.  A single row-wide max shift is constant within
    # every head block, so it cancels exactly in p / denom.
    p = jnp.exp(scores - jnp.max(scores, axis=-1, keepdims=True))
    blk_ones = _block_eq((C, C), R, R)               # block-diagonal ones, (C, C)
    denom = jnp.dot(p, blk_ones, preferred_element_type=jnp.float32)      # (R, C)
    attn = p * pl.reciprocal(jnp.maximum(denom, 1e-30), approx=True)

    # Context: each head lands directly in its own column block of (R, D).
    ctx = jnp.dot(attn, vhat, preferred_element_type=jnp.float32)         # (R, D)
    x = x + jnp.dot(ctx, wo, preferred_element_type=jnp.float32) + bo

    # ---------- sublayer 1: x + feed_forward(LN2(x)) ----------
    xn2 = _layer_norm(x, ln2a, ln2b)
    hidden = jnp.maximum(
        jnp.dot(xn2, w1, preferred_element_type=jnp.float32) + b1, 0.0)
    ff = jnp.dot(hidden, w2_ref[...], preferred_element_type=jnp.float32) + b2
    out_ref[...] = (x + ff).astype(out_ref.dtype)


@jax.jit
def encoder_layer(x, mask, params):
    (wq, bq, wk, bk, wv, bv, wo, bo, w1, b1, w2, b2,
     ln1a, ln1b, ln2a, ln2b) = params

    # Host-side packing: fused QKV (with the 1/sqrt(DH) scale folded into the
    # Q columns), one row-32 weight slab, one slab of small per-feature vectors.
    scale = DH ** -0.5
    wqkv = jnp.concatenate([wq * scale, wk, wv], axis=1)          # (D, 3D)
    bqkv = jnp.concatenate([bq * scale, bk, bv], axis=1)          # (1, 3D)
    w_slab = jnp.concatenate([wqkv, wo, w1], axis=1)              # (D, 3D + D + DFF)

    width = 3 * D
    pad = lambda vv: jnp.pad(vv, ((0, 0), (0, width - vv.shape[1])))
    vecs = jnp.concatenate(
        [pad(ln1a), pad(ln1b), pad(ln2a), pad(ln2b),
         pad(bo), pad(b2), pad(b1), bqkv], axis=0)                # (8, 3D)

    # Additive attention bias, (B*S, H*B*S):
    #   column h*(B*S) + b2*S + j  <->  (head h, key batch b2, key position j)
    #   -1e9 for masked keys (matches masked_fill), -2e9 for cross-batch columns.
    keep = (mask[:, 0, :] != 0)                                   # (B, S)
    same_b = (jnp.arange(B)[:, None, None, None] ==
              jnp.arange(B)[None, None, :, None])                 # (B, 1, B, 1)
    bias4 = jnp.where(keep[None, None, :, :], 0.0, -1e9)          # (1, 1, B, S)
    bias4 = jnp.where(same_b, bias4, -2e9)                        # (B, 1, B, S)
    bias = jnp.broadcast_to(bias4, (B, S, B, S)).reshape(R, R)
    bias = jnp.tile(bias, (1, H)).astype(jnp.float32)             # (R, C)

    # Whole problem (<0.1 MiB) fits in VMEM: single grid point, full-array
    # blocks, 5 input refs total.  (B,S,D)<->(B*S,D) reshapes are wrapper-side.
    out = pl.pallas_call(
        encoder_layer_kernel,
        out_shape=jax.ShapeDtypeStruct((R, D), jnp.float32),
    )(x.reshape(R, D), bias, w_slab, w2, vecs)
    return out.reshape(B, S, D)


def init_params(key):
    ks = jax.random.split(key, 8)
    scale = 0.1
    wq = scale * jax.random.normal(ks[0], (D, D), jnp.float32)
    wk = scale * jax.random.normal(ks[1], (D, D), jnp.float32)
    wv = scale * jax.random.normal(ks[2], (D, D), jnp.float32)
    wo = scale * jax.random.normal(ks[3], (D, D), jnp.float32)
    bq = scale * jax.random.normal(ks[4], (1, D), jnp.float32)
    bk = jnp.zeros((1, D), jnp.float32)
    bv = jnp.zeros((1, D), jnp.float32)
    bo = jnp.zeros((1, D), jnp.float32)
    w1 = scale * jax.random.normal(ks[5], (D, DFF), jnp.float32)
    b1 = scale * jax.random.normal(ks[6], (1, DFF), jnp.float32)
    w2 = scale * jax.random.normal(ks[7], (DFF, D), jnp.float32)
    b2 = jnp.zeros((1, D), jnp.float32)
    # LayerNorm params: a_2 = ones, b_2 = zeros (as in the module's __init__)
    ln1a = jnp.ones((1, D), jnp.float32)
    ln1b = jnp.zeros((1, D), jnp.float32)
    ln2a = jnp.ones((1, D), jnp.float32)
    ln2b = jnp.zeros((1, D), jnp.float32)
    return (wq, bq, wk, bk, wv, bv, wo, bo, w1, b1, w2, b2,
            ln1a, ln1b, ln2a, ln2b)


if __name__ == "__main__":
    key = jax.random.PRNGKey(0)
    kx, kp = jax.random.split(key)
    x = jax.random.normal(kx, (B, S, D), jnp.float32)
    mask = jnp.ones((B, 1, S), jnp.float32)      # all key positions visible
    params = init_params(kp)

    out = encoder_layer(x, mask, params)
    jax.block_until_ready(out)
    assert out.shape == (B, S, D)
    assert bool(jnp.all(jnp.isfinite(out)))
    print("KERNEL_OK")
</pallas_src>

<mosaic_0001>
module attributes {stable_mosaic.version = 11 : i64} {
  func.func @encoder_layer_kernel(%arg0: memref<16x32xf32, #tpu.memory_space<vmem>>, %arg1: memref<16x64xf32, #tpu.memory_space<vmem>>, %arg2: memref<32x192xf32, #tpu.memory_space<vmem>>, %arg3: memref<64x32xf32, #tpu.memory_space<vmem>>, %arg4: memref<8x96xf32, #tpu.memory_space<vmem>>, %arg5: memref<16x32xf32, #tpu.memory_space<vmem>>) attributes {dimension_semantics = [], scalar_prefetch = 0 : i64, scratch_operands = 0 : i64, tpu.core_type = #tpu.core_type<tc>} {
    %c0 = arith.constant 0 : index
    %c0_0 = arith.constant 0 : index
    %0 = vector.load %arg0[%c0, %c0_0] : memref<16x32xf32, #tpu.memory_space<vmem>>, vector<16x32xf32>
    %c0_1 = arith.constant 0 : index
    %c0_2 = arith.constant 0 : index
    %1 = vector.load %arg4[%c0_1, %c0_2] : memref<8x96xf32, #tpu.memory_space<vmem>>, vector<8x96xf32>
    %2 = vector.extract_strided_slice %1 {offsets = [0, 0], sizes = [1, 32], strides = [1, 1]} : vector<8x96xf32> to vector<1x32xf32>
    %3 = vector.extract_strided_slice %1 {offsets = [1, 0], sizes = [1, 32], strides = [1, 1]} : vector<8x96xf32> to vector<1x32xf32>
    %4 = vector.extract_strided_slice %1 {offsets = [2, 0], sizes = [1, 32], strides = [1, 1]} : vector<8x96xf32> to vector<1x32xf32>
    %5 = vector.extract_strided_slice %1 {offsets = [3, 0], sizes = [1, 32], strides = [1, 1]} : vector<8x96xf32> to vector<1x32xf32>
    %6 = vector.extract_strided_slice %1 {offsets = [4, 0], sizes = [1, 32], strides = [1, 1]} : vector<8x96xf32> to vector<1x32xf32>
    %7 = vector.extract_strided_slice %1 {offsets = [5, 0], sizes = [1, 32], strides = [1, 1]} : vector<8x96xf32> to vector<1x32xf32>
    %8 = vector.extract_strided_slice %1 {offsets = [6, 0], sizes = [1, 64], strides = [1, 1]} : vector<8x96xf32> to vector<1x64xf32>
    %9 = vector.extract_strided_slice %1 {offsets = [7, 0], sizes = [1, 96], strides = [1, 1]} : vector<8x96xf32> to vector<1x96xf32>
    %c0_3 = arith.constant 0 : index
    %c0_4 = arith.constant 0 : index
    %10 = vector.load %arg2[%c0_3, %c0_4] : memref<32x192xf32, #tpu.memory_space<vmem>>, vector<32x96xf32>
    %c0_5 = arith.constant 0 : index
    %c96 = arith.constant 96 : index
    %11 = vector.load %arg2[%c0_5, %c96] : memref<32x192xf32, #tpu.memory_space<vmem>>, vector<32x32xf32>
    %c0_6 = arith.constant 0 : index
    %c128 = arith.constant 128 : index
    %12 = vector.load %arg2[%c0_6, %c128] : memref<32x192xf32, #tpu.memory_space<vmem>>, vector<32x64xf32>
    %cst = arith.constant dense<0.000000e+00> : vector<16xf32>
    %13 = vector.multi_reduction <add>, %0, %cst [1] : vector<16x32xf32> to vector<16xf32>
    %14 = vector.shape_cast %13 : vector<16xf32> to vector<16x1xf32>
    %cst_7 = arith.constant 3.200000e+01 : f32
    %15 = vector.broadcast %cst_7 : f32 to vector<16x1xf32>
    %16 = arith.divf %14, %15 : vector<16x1xf32>
    %17 = vector.broadcast %16 : vector<16x1xf32> to vector<16x32xf32>
    %18 = arith.subf %0, %17 : vector<16x32xf32>
    %19 = arith.mulf %18, %18 : vector<16x32xf32>
    %cst_8 = arith.constant dense<0.000000e+00> : vector<16xf32>
    %20 = vector.multi_reduction <add>, %19, %cst_8 [1] : vector<16x32xf32> to vector<16xf32>
    %21 = vector.shape_cast %20 : vector<16xf32> to vector<16x1xf32>
    %cst_9 = arith.constant 0.0322580636 : f32
    %22 = vector.broadcast %cst_9 : f32 to vector<16x1xf32>
    %23 = arith.mulf %21, %22 : vector<16x1xf32>
    %24 = math.sqrt %23 : vector<16x1xf32>
    %cst_10 = arith.constant 9.99999997E-7 : f32
    %25 = vector.broadcast %cst_10 : f32 to vector<16x1xf32>
    %26 = arith.addf %24, %25 : vector<16x1xf32>
    %27 = tpu.reciprocal %26 {approx = true} : vector<16x1xf32> -> vector<16x1xf32>
    %28 = vector.broadcast %2 : vector<1x32xf32> to vector<16x32xf32>
    %29 = arith.mulf %28, %18 : vector<16x32xf32>
    %30 = vector.broadcast %27 : vector<16x1xf32> to vector<16x32xf32>
    %31 = arith.mulf %29, %30 : vector<16x32xf32>
    %32 = vector.broadcast %3 : vector<1x32xf32> to vector<16x32xf32>
    %33 = arith.addf %31, %32 : vector<16x32xf32>
    %cst_11 = arith.constant dense<0.000000e+00> : vector<16x96xf32>
    %34 = tpu.matmul %33, %10, %cst_11 {dimension_numbers = #tpu.dot_dimension_numbers<[1], [0], [0], [1], [0, 0, 1, 1], [], []>} : vector<16x32xf32>, vector<32x96xf32>, vector<16x96xf32> -> vector<16x96xf32>
    %35 = vector.broadcast %9 : vector<1x96xf32> to vector<16x96xf32>
    %36 = arith.addf %34, %35 : vector<16x96xf32>
    %37 = vector.extract_strided_slice %36 {offsets = [0, 0], sizes = [16, 32], strides = [1, 1]} : vector<16x96xf32> to vector<16x32xf32>
    %38 = vector.extract_strided_slice %36 {offsets = [0, 32], sizes = [16, 32], strides = [1, 1]} : vector<16x96xf32> to vector<16x32xf32>
    %39 = vector.extract_strided_slice %36 {offsets = [0, 64], sizes = [16, 32], strides = [1, 1]} : vector<16x96xf32> to vector<16x32xf32>
    %40 = tpu.iota {dimensions = array<i32: 0>} : vector<64x32xi32>
    %41 = arith.sitofp %40 : vector<64x32xi32> to vector<64x32xf32>
    %42 = tpu.iota {dimensions = array<i32: 1>} : vector<64x32xi32>
    %43 = arith.sitofp %42 : vector<64x32xi32> to vector<64x32xf32>
    %cst_12 = arith.constant 6.250000e-02 : f32
    %44 = vector.broadcast %cst_12 : f32 to vector<64x32xf32>
    %45 = arith.mulf %41, %44 : vector<64x32xf32>
    %46 = math.floor %45 : vector<64x32xf32>
    %cst_13 = arith.constant 1.250000e-01 : f32
    %47 = vector.broadcast %cst_13 : f32 to vector<64x32xf32>
    %48 = arith.mulf %43, %47 : vector<64x32xf32>
    %49 = math.floor %48 : vector<64x32xf32>
    %50 = arith.cmpf oeq, %46, %49 : vector<64x32xf32>
    %51 = arith.extui %50 : vector<64x32xi1> to vector<64x32xi32>
    %52 = arith.sitofp %51 : vector<64x32xi32> to vector<64x32xf32>
    %53 = vector.shape_cast %38 : vector<16x32xf32> to vector<1x16x32xf32>
    %54 = vector.shape_cast %53 : vector<1x16x32xf32> to vector<1x16x32xf32>
    %55 = vector.broadcast %54 : vector<1x16x32xf32> to vector<4x16x32xf32>
    %56 = vector.shape_cast %55 : vector<4x16x32xf32> to vector<64x32xf32>
    %57 = arith.mulf %56, %52 : vector<64x32xf32>
    %58 = vector.shape_cast %39 : vector<16x32xf32> to vector<1x16x32xf32>
    %59 = vector.shape_cast %58 : vector<1x16x32xf32> to vector<1x16x32xf32>
    %60 = vector.broadcast %59 : vector<1x16x32xf32> to vector<4x16x32xf32>
    %61 = vector.shape_cast %60 : vector<4x16x32xf32> to vector<64x32xf32>
    %62 = arith.mulf %61, %52 : vector<64x32xf32>
    %cst_14 = arith.constant dense<0.000000e+00> : vector<16x64xf32>
    %63 = tpu.matmul %37, %57, %cst_14 {dimension_numbers = #tpu.dot_dimension_numbers<[1], [1], [0], [0], [0, 0, 1, 0], [], []>} : vector<16x32xf32>, vector<64x32xf32>, vector<16x64xf32> -> vector<16x64xf32>
    %c0_15 = arith.constant 0 : index
    %c0_16 = arith.constant 0 : index
    %64 = vector.load %arg1[%c0_15, %c0_16] : memref<16x64xf32, #tpu.memory_space<vmem>>, vector<16x64xf32>
    %65 = arith.addf %63, %64 : vector<16x64xf32>
    %cst_17 = arith.constant dense<0xFF800000> : vector<16xf32>
    %66 = vector.multi_reduction <maximumf>, %65, %cst_17 [1] : vector<16x64xf32> to vector<16xf32>
    %67 = vector.shape_cast %66 : vector<16xf32> to vector<16x1xf32>
    %68 = vector.broadcast %67 : vector<16x1xf32> to vector<16x64xf32>
    %69 = arith.subf %65, %68 : vector<16x64xf32>
    %70 = math.exp %69 : vector<16x64xf32>
    %71 = tpu.iota {dimensions = array<i32: 0>} : vector<64x64xi32>
    %72 = arith.sitofp %71 : vector<64x64xi32> to vector<64x64xf32>
    %73 = tpu.iota {dimensions = array<i32: 1>} : vector<64x64xi32>
    %74 = arith.sitofp %73 : vector<64x64xi32> to vector<64x64xf32>
    %cst_18 = arith.constant 6.250000e-02 : f32
    %75 = vector.broadcast %cst_18 : f32 to vector<64x64xf32>
    %76 = arith.mulf %72, %75 : vector<64x64xf32>
    %77 = math.floor %76 : vector<64x64xf32>
    %cst_19 = arith.constant 6.250000e-02 : f32
    %78 = vector.broadcast %cst_19 : f32 to vector<64x64xf32>
    %79 = arith.mulf %74, %78 : vector<64x64xf32>
    %80 = math.floor %79 : vector<64x64xf32>
    %81 = arith.cmpf oeq, %77, %80 : vector<64x64xf32>
    %82 = arith.extui %81 : vector<64x64xi1> to vector<64x64xi32>
    %83 = arith.sitofp %82 : vector<64x64xi32> to vector<64x64xf32>
    %cst_20 = arith.constant dense<0.000000e+00> : vector<16x64xf32>
    %84 = tpu.matmul %70, %83, %cst_20 {dimension_numbers = #tpu.dot_dimension_numbers<[1], [0], [0], [1], [0, 0, 1, 1], [], []>} : vector<16x64xf32>, vector<64x64xf32>, vector<16x64xf32> -> vector<16x64xf32>
    %cst_21 = arith.constant 1.000000e-30 : f32
    %85 = vector.broadcast %cst_21 : f32 to vector<16x64xf32>
    %86 = arith.maximumf %84, %85 : vector<16x64xf32>
    %87 = tpu.reciprocal %86 {approx = true} : vector<16x64xf32> -> vector<16x64xf32>
    %88 = arith.mulf %70, %87 : vector<16x64xf32>
    %cst_22 = arith.constant dense<0.000000e+00> : vector<16x32xf32>
    %89 = tpu.matmul %88, %62, %cst_22 {dimension_numbers = #tpu.dot_dimension_numbers<[1], [0], [0], [1], [0, 0, 1, 1], [], []>} : vector<16x64xf32>, vector<64x32xf32>, vector<16x32xf32> -> vector<16x32xf32>
    %cst_23 = arith.constant dense<0.000000e+00> : vector<16x32xf32>
    %90 = tpu.matmul %89, %11, %cst_23 {dimension_numbers = #tpu.dot_dimension_numbers<[1], [0], [0], [1], [0, 0, 1, 1], [], []>} : vector<16x32xf32>, vector<32x32xf32>, vector<16x32xf32> -> vector<16x32xf32>
    %91 = arith.addf %0, %90 : vector<16x32xf32>
    %92 = vector.broadcast %6 : vector<1x32xf32> to vector<16x32xf32>
    %93 = arith.addf %91, %92 : vector<16x32xf32>
    %cst_24 = arith.constant dense<0.000000e+00> : vector<16xf32>
    %94 = vector.multi_reduction <add>, %93, %cst_24 [1] : vector<16x32xf32> to vector<16xf32>
    %95 = vector.shape_cast %94 : vector<16xf32> to vector<16x1xf32>
    %cst_25 = arith.constant 3.200000e+01 : f32
    %96 = vector.broadcast %cst_25 : f32 to vector<16x1xf32>
    %97 = arith.divf %95, %96 : vector<16x1xf32>
    %98 = vector.broadcast %97 : vector<16x1xf32> to vector<16x32xf32>
    %99 = arith.subf %93, %98 : vector<16x32xf32>
    %100 = arith.mulf %99, %99 : vector<16x32xf32>
    %cst_26 = arith.constant dense<0.000000e+00> : vector<16xf32>
    %101 = vector.multi_reduction <add>, %100, %cst_26 [1] : vector<16x32xf32> to vector<16xf32>
    %102 = vector.shape_cast %101 : vector<16xf32> to vector<16x1xf32>
    %cst_27 = arith.constant 0.0322580636 : f32
    %103 = vector.broadcast %cst_27 : f32 to vector<16x1xf32>
    %104 = arith.mulf %102, %103 : vector<16x1xf32>
    %105 = math.sqrt %104 : vector<16x1xf32>
    %cst_28 = arith.constant 9.99999997E-7 : f32
    %106 = vector.broadcast %cst_28 : f32 to vector<16x1xf32>
    %107 = arith.addf %105, %106 : vector<16x1xf32>
    %108 = tpu.reciprocal %107 {approx = true} : vector<16x1xf32> -> vector<16x1xf32>
    %109 = vector.broadcast %4 : vector<1x32xf32> to vector<16x32xf32>
    %110 = arith.mulf %109, %99 : vector<16x32xf32>
    %111 = vector.broadcast %108 : vector<16x1xf32> to vector<16x32xf32>
    %112 = arith.mulf %110, %111 : vector<16x32xf32>
    %113 = vector.broadcast %5 : vector<1x32xf32> to vector<16x32xf32>
    %114 = arith.addf %112, %113 : vector<16x32xf32>
    %cst_29 = arith.constant dense<0.000000e+00> : vector<16x64xf32>
    %115 = tpu.matmul %114, %12, %cst_29 {dimension_numbers = #tpu.dot_dimension_numbers<[1], [0], [0], [1], [0, 0, 1, 1], [], []>} : vector<16x32xf32>, vector<32x64xf32>, vector<16x64xf32> -> vector<16x64xf32>
    %116 = vector.broadcast %8 : vector<1x64xf32> to vector<16x64xf32>
    %117 = arith.addf %115, %116 : vector<16x64xf32>
    %cst_30 = arith.constant 0.000000e+00 : f32
    %118 = vector.broadcast %cst_30 : f32 to vector<16x64xf32>
    %119 = arith.maximumf %117, %118 : vector<16x64xf32>
    %c0_31 = arith.constant 0 : index
    %c0_32 = arith.constant 0 : index
    %120 = vector.load %arg3[%c0_31, %c0_32] : memref<64x32xf32, #tpu.memory_space<vmem>>, vector<64x32xf32>
    %cst_33 = arith.constant dense<0.000000e+00> : vector<16x32xf32>
    %121 = tpu.matmul %119, %120, %cst_33 {dimension_numbers = #tpu.dot_dimension_numbers<[1], [0], [0], [1], [0, 0, 1, 1], [], []>} : vector<16x64xf32>, vector<64x32xf32>, vector<16x32xf32> -> vector<16x32xf32>
    %122 = vector.broadcast %7 : vector<1x32xf32> to vector<16x32xf32>
    %123 = arith.addf %121, %122 : vector<16x32xf32>
    %124 = arith.addf %93, %123 : vector<16x32xf32>
    %c0_34 = arith.constant 0 : index
    %c0_35 = arith.constant 0 : index
    %125 = vector.load %arg5[%c0_34, %c0_35] : memref<16x32xf32, #tpu.memory_space<vmem>>, vector<16x32xf32>
    tpu.vector_store %arg5[%c0_34, %c0_35], %124 {strides = array<i32>} : memref<16x32xf32, #tpu.memory_space<vmem>>, vector<16x32xf32>,
    return
  }
}

</mosaic_0001>

<llo_original>
// kernel: tile.7
$region0: #{tile.7}
  %s0 = inlined_call_operand.vmem [shape: f32[16,4,16], index: 0, kind: input, shape index: {}]
  %s1 = inlined_call_operand.vmem [shape: f32[16,64], index: 1, kind: output, shape index: {}]
  $region1: #{tile.7} parent=0
    #allocation0 [shape = 'u8[65536]{0}', space=vmem, size = 0x10000, scoped, tag = 'scoped mem for input reshape']
    %s3 = sshllo.u32 0, 4
    %s4 = smul.addr 4, 15
    %s5 = scalar_lea.vmem %s0, %s4
    %v6 = vld [vmem:[%s5] sm:%s3]
    %s7 = scalar_lea.vmem [#allocation0], 120
    %8 = vst [vmem:[%s7] sm:%s3] %v6
    %s9 = smul.addr 4, 14
    %s10 = scalar_lea.vmem %s0, %s9
    %v11 = vld [vmem:[%s10] sm:%s3]
    %s12 = scalar_lea.vmem [#allocation0], 112
    %13 = vst [vmem:[%s12] sm:%s3] %v11
    %s14 = smul.addr 4, 13
    %s15 = scalar_lea.vmem %s0, %s14
    %v16 = vld [vmem:[%s15] sm:%s3]
    %s17 = scalar_lea.vmem [#allocation0], 104
    %18 = vst [vmem:[%s17] sm:%s3] %v16
    %s19 = smul.addr 4, 12
    %s20 = scalar_lea.vmem %s0, %s19
    %v21 = vld [vmem:[%s20] sm:%s3]
    %s22 = scalar_lea.vmem [#allocation0], 96
    %23 = vst [vmem:[%s22] sm:%s3] %v21
    %s24 = smul.addr 4, 11
    %s25 = scalar_lea.vmem %s0, %s24
    %v26 = vld [vmem:[%s25] sm:%s3]
    %s27 = scalar_lea.vmem [#allocation0], 88
    %28 = vst [vmem:[%s27] sm:%s3] %v26
    %s29 = smul.addr 4, 10
    %s30 = scalar_lea.vmem %s0, %s29
    %v31 = vld [vmem:[%s30] sm:%s3]
    %s32 = scalar_lea.vmem [#allocation0], 80
    %33 = vst [vmem:[%s32] sm:%s3] %v31
    %s34 = smul.addr 4, 9
    %s35 = scalar_lea.vmem %s0, %s34
    %v36 = vld [vmem:[%s35] sm:%s3]
    %s37 = scalar_lea.vmem [#allocation0], 72
    %38 = vst [vmem:[%s37] sm:%s3] %v36
    %s39 = smul.addr 4, 8
    %s40 = scalar_lea.vmem %s0, %s39
    %v41 = vld [vmem:[%s40] sm:%s3]
    %s42 = scalar_lea.vmem [#allocation0], 64
    %43 = vst [vmem:[%s42] sm:%s3] %v41
    %s44 = smul.addr 4, 7
    %s45 = scalar_lea.vmem %s0, %s44
    %v46 = vld [vmem:[%s45] sm:%s3]
    %s47 = scalar_lea.vmem [#allocation0], 56
    %48 = vst [vmem:[%s47] sm:%s3] %v46
    %s49 = smul.addr 4, 6
    %s50 = scalar_lea.vmem %s0, %s49
    %v51 = vld [vmem:[%s50] sm:%s3]
    %s52 = scalar_lea.vmem [#allocation0], 48
    %53 = vst [vmem:[%s52] sm:%s3] %v51
    %s54 = smul.addr 4, 5
    %s55 = scalar_lea.vmem %s0, %s54
    %v56 = vld [vmem:[%s55] sm:%s3]
    %s57 = scalar_lea.vmem [#allocation0], 40
    %58 = vst [vmem:[%s57] sm:%s3] %v56
    %s59 = smul.addr 4, 4
    %s60 = scalar_lea.vmem %s0, %s59
    %v61 = vld [vmem:[%s60] sm:%s3]
    %s62 = scalar_lea.vmem [#allocation0], 32
    %63 = vst [vmem:[%s62] sm:%s3] %v61
    %s64 = smul.addr 4, 3
    %s65 = scalar_lea.vmem %s0, %s64
    %v66 = vld [vmem:[%s65] sm:%s3]
    %s67 = scalar_lea.vmem [#allocation0], 24
    %68 = vst [vmem:[%s67] sm:%s3] %v66
    %s69 = smul.addr 4, 2
    %s70 = scalar_lea.vmem %s0, %s69
    %v71 = vld [vmem:[%s70] sm:%s3]
    %s72 = scalar_lea.vmem [#allocation0], 16
    %73 = vst [vmem:[%s72] sm:%s3] %v71
    %s74 = scalar_lea.vmem %s0, 4
    %v75 = vld [vmem:[%s74] sm:%s3]
    %s76 = scalar_lea.vmem [#allocation0], 8
    %77 = vst [vmem:[%s76] sm:%s3] %v75
    %v78 = vld [vmem:[%s0] sm:%s3]
    %79 = vst [vmem:[#allocation0] sm:%s3] %v78
    %v80 = vld [vmem:[#allocation0] ss:$8 sm:$0xf]
    %v81 = vld [vmem:[#allocation0] ss:$8 sm:$0xf0]
    %vm82 = vcmask 1047556
    %v83 = vsel %vm82, %v81, %v80
    %vm84 = vcmask 130048
    %85 = vst.msk [vmem:[%s1] sm:$0xff] %vm84, %v83
    %s86 = scalar_lea.vmem [#allocation0], 64
    %v87 = vld [vmem:[%s86] ss:$8 sm:$0xf]
    %s88 = scalar_lea.vmem [#allocation0], 64
    %v89 = vld [vmem:[%s88] ss:$8 sm:$0xf0]
    %vm90 = vcmask 1047556
    %v91 = vsel %vm90, %v89, %v87
    %vm92 = vcmask 130048
    %s93 = scalar_lea.vmem %s1, 8
    %94 = vst.msk [vmem:[%s93] sm:$0xff] %vm92, %v91
    %s95 = scalar_lea.vmem [#allocation0], 3
    %v96 = vld [vmem:[%s95] ss:$8 sm:$0xf]
    %s97 = scalar_lea.vmem [#allocation0], 3
    %v98 = vld [vmem:[%s97] ss:$8 sm:$0xf0]
    %vm99 = vcmask 1047556
    %v100 = vsel %vm99, %v98, %v96
    %101 = vrot.lane.b32.xlu0 %v100, 48
    %v102 = vpop.permute.xlu0 %101
    %vm103 = vcmask 523648
    %104 = vst.msk [vmem:[%s1] sm:$0xff] %vm103, %v102
    %s105 = scalar_lea.vmem [#allocation0], 67
    %v106 = vld [vmem:[%s105] ss:$8 sm:$0xf]
    %s107 = scalar_lea.vmem [#allocation0], 67
    %v108 = vld [vmem:[%s107] ss:$8 sm:$0xf0]
    %vm109 = vcmask 1047556
    %v110 = vsel %vm109, %v108, %v106
    %111 = vrot.lane.b32.xlu0 %v110, 48
    %v112 = vpop.permute.xlu0 %111
    %vm113 = vcmask 523648
    %s114 = scalar_lea.vmem %s1, 8
    %115 = vst.msk [vmem:[%s114] sm:$0xff] %vm113, %v112
    %s116 = scalar_lea.vmem [#allocation0], 2
    %v117 = vld [vmem:[%s116] ss:$8 sm:$0xf]
    %s118 = scalar_lea.vmem [#allocation0], 2
    %v119 = vld [vmem:[%s118] ss:$8 sm:$0xf0]
    %vm120 = vcmask 1047556
    %v121 = vsel %vm120, %v119, %v117
    %122 = vrot.lane.b32.xlu0 %v121, 32
    %v123 = vpop.permute.xlu0 %122
    %vm124 = vcmask 392448
    %125 = vst.msk [vmem:[%s1] sm:$0xff] %vm124, %v123
    %s126 = scalar_lea.vmem [#allocation0], 66
    %v127 = vld [vmem:[%s126] ss:$8 sm:$0xf]
    %s128 = scalar_lea.vmem [#allocation0], 66
    %v129 = vld [vmem:[%s128] ss:$8 sm:$0xf0]
    %vm130 = vcmask 1047556
    %v131 = vsel %vm130, %v129, %v127
    %132 = vrot.lane.b32.xlu0 %v131, 32
    %v133 = vpop.permute.xlu0 %132
    %vm134 = vcmask 392448
    %s135 = scalar_lea.vmem %s1, 8
    %136 = vst.msk [vmem:[%s135] sm:$0xff] %vm134, %v133
    %s137 = scalar_lea.vmem [#allocation0], 1
    %v138 = vld [vmem:[%s137] ss:$8 sm:$0xf]
    %s139 = scalar_lea.vmem [#allocation0], 1
    %v140 = vld [vmem:[%s139] ss:$8 sm:$0xf0]
    %vm141 = vcmask 1047556
    %v142 = vsel %vm141, %v140, %v138
    %143 = vrot.lane.b32.xlu0 %v142, 16
    %v144 = vpop.permute.xlu0 %143
    %vm145 = vcmask 261248
    %146 = vst.msk [vmem:[%s1] sm:$0xff] %vm145, %v144
    %s147 = scalar_lea.vmem [#allocation0], 65
    %v148 = vld [vmem:[%s147] ss:$8 sm:$0xf]
    %s149 = scalar_lea.vmem [#allocation0], 65
    %v150 = vld [vmem:[%s149] ss:$8 sm:$0xf0]
    %vm151 = vcmask 1047556
    %v152 = vsel %vm151, %v150, %v148
    %153 = vrot.lane.b32.xlu0 %v152, 16
    %v154 = vpop.permute.xlu0 %153
    %vm155 = vcmask 261248
    %s156 = scalar_lea.vmem %s1, 8
    %157 = vst.msk [vmem:[%s156] sm:$0xff] %vm155, %v154

// kernel: encoder_layer.1
$region0: #{encoder_layer.1}
  #allocation0 [shape = 'u32[]', space=smem, size = 0x4, offset = 0x4, fixed_abs, tag = 'smem constant byte address 0x4 - core index']
  #allocation1 [shape = 'u32[144,128]{1,0:T(1,128)}', space=vmem, size = 0x12000, scoped, tag = 'internal scratch']
  %s0 = inlined_call_operand.vmem [shape: f32[16,32], index: 0, kind: input, shape index: {}]
  %s1 = inlined_call_operand.vmem [shape: f32[16,64], index: 1, kind: input, shape index: {}]
  %s2 = inlined_call_operand.vmem [shape: f32[32,192], index: 2, kind: input, shape index: {}]
  %s3 = inlined_call_operand.vmem [shape: f32[64,32], index: 3, kind: input, shape index: {}]
  %s4 = inlined_call_operand.vmem [shape: f32[8,96], index: 4, kind: input, shape index: {}]
  %s5 = inlined_call_operand.hbm [shape: f32[16,32], index: 5, kind: output, shape index: {}]
  %s6 = sld [smem:[#allocation0]]
  $region30: #{encoder_layer.1} parent=0
    _
  %s8 = ssub.s32 1, %s6
  %s9 = scalar_select 0, %s8, %s6
  $region1: #{encoder_layer.1} parent=0
    #allocation2 [shape = 'u8[8192]{0}', space=vmem, size = 0x2000, scoped, tag = 'output window, operand 0, single buffered']
    #allocation3 [shape = 's32[1]{0}', space=sflag, size = 0x4, scoped, tag = 'scoped memory for encoder_layer.1']
    %10 = vsyncpa [#allocation3], 0
    // Predicated region
    $region2: #{encoder_layer.1} parent=1 // pred_check
      _
    $region3: #{encoder_layer.1} parent=1 // pred_check_branch
      %12 = sbr.rel (0) target = $region5
    $region4: #{encoder_layer.1} parent=1 // pred_region
      _
    $region5: #{encoder_layer.1} parent=1 // pred_fallthru
      _
    // Predicated region
    $region6: #{encoder_layer.1} parent=1 // pred_check
      _
    $region7: #{encoder_layer.1} parent=1 // pred_check_branch
      %14 = sbr.rel (0) target = $region9
    $region8: #{encoder_layer.1} parent=1 // pred_region
      _
    $region9: #{encoder_layer.1} parent=1 // pred_fallthru
      _
    // Predicated region
    $region10: #{encoder_layer.1} parent=1 // pred_check
      _
    $region11: #{encoder_layer.1} parent=1 // pred_check_branch
      %16 = sbr.rel (0) target = $region13
    $region12: #{encoder_layer.1} parent=1 // pred_region
      _
    $region13: #{encoder_layer.1} parent=1 // pred_fallthru
      _
    // Predicated region
    $region14: #{encoder_layer.1} parent=1 // pred_check
      _
    $region15: #{encoder_layer.1} parent=1 // pred_check_branch
      %18 = sbr.rel (0) target = $region17
    $region16: #{encoder_layer.1} parent=1 // pred_region
      _
    $region17: #{encoder_layer.1} parent=1 // pred_fallthru
      _
    // Predicated region
    $region18: #{encoder_layer.1} parent=1 // pred_check
      _
    $region19: #{encoder_layer.1} parent=1 // pred_check_branch
      %20 = sbr.rel (0) target = $region21
    $region20: #{encoder_layer.1} parent=1 // pred_region
      _
    $region21: #{encoder_layer.1} parent=1 // pred_fallthru
      _
    %v21 = vld [vmem:[%s0] sm:$0xff]
    %v22 = vld [vmem:[%s0 + $0x8] sm:$0xff]
    %v23 = vld [vmem:[%s4] sm:$0xff]
    %v24 = vld [vmem:[%s2] sm:$0xff]
    %v25 = vld [vmem:[%s2 + $0x10] sm:$0xff]
    %v26 = vld [vmem:[%s2 + $0x20] sm:$0xff]
    %v27 = vld [vmem:[%s2 + $0x30] sm:$0xff]
    %v28 = vld [vmem:[%s2 + $0x8] sm:$0xff]
    %v29 = vld [vmem:[%s2 + $0x18] sm:$0xff]
    %v30 = vld [vmem:[%s2 + $0x28] sm:$0xff]
    %v31 = vld [vmem:[%s2 + $0x38] sm:$0xff]
    %vm32 = vcmask 261120
    %v33 = vsel %vm32, %v21, 0.0
    %34 = vadd.xlane.f32.xlu0 %v33
    %v35 = vpop.xlane.xlu0 %34
    %v36 = vsel %vm32, %v22, 0.0
    %37 = vadd.xlane.f32.xlu0 %v36
    %v38 = vpop.xlane.xlu0 %37
    %v39 = vrcp.pop 32.0
    %v40 = vmul.f32 %v35, %v39
    %v41 = vmul.f32 %v38, %v39
    %v42 = vsub.f32 %v21, %v40
    %v43 = vsub.f32 %v22, %v41
    %v44 = vmul.f32 %v42, %v42
    %v45 = vmul.f32 %v43, %v43
    %v46 = vsel %vm32, %v44, 0.0
    %47 = vadd.xlane.f32.xlu0 %v46
    %v48 = vpop.xlane.xlu0 %47
    %v49 = vsel %vm32, %v45, 0.0
    %50 = vadd.xlane.f32.xlu0 %v49
    %v51 = vpop.xlane.xlu0 %50
    %v52 = vmul.f32 %v48, 0.032258064
    %v53 = vmul.f32 %v51, 0.032258064
    %v54 = vrsqrt.pop %v52
    %v55 = vmul.f32 %v52, %v54
    %vm56 = vcmp.eq.f32.partialorder %v52, inf
    %v57 = vsel %vm56, %v52, %v55
    %vm58 = vcmp.eq.f32.partialorder %v52, 0.0
    %v59 = vand.u32 %v52, 2147483648
    %v60 = vsel %vm58, %v59, %v57
    %v61 = vrsqrt.pop %v53
    %v62 = vmul.f32 %v53, %v61
    %vm63 = vcmp.eq.f32.partialorder %v53, inf
    %v64 = vsel %vm63, %v53, %v62
    %vm65 = vcmp.eq.f32.partialorder %v53, 0.0
    %v66 = vand.u32 %v53, 2147483648
    %v67 = vsel %vm65, %v66, %v64
    %v68 = vadd.f32 %v60, 1e-06
    %v69 = vadd.f32 %v67, 1e-06
    %v70 = vrcp.pop %v68
    %v71 = vrcp.pop %v69
    %v72 = vlaneseq
    %v73 = vshrl.u32 %v72, 7
    %v74 = vsub.s32 0, %v73
    %v75 = vrot.slane %v23, %v74
    %v76 = vmul.f32 %v75, %v42
    %v77 = vmul.f32 %v75, %v43
    %v78 = vmul.f32 %v76, %v70
    %v79 = vmul.f32 %v77, %v71
    %v80 = vlaneseq
    %v81 = vshrl.u32 %v80, 7
    %v82 = vsub.s32 1, %v81
    %v83 = vrot.slane %v23, %v82
    %v84 = vadd.f32 %v78, %v83
    %v85 = vadd.f32 %v79, %v83
    %v86 = vlaneseq
    %v87 = vshrl.u32 %v86, 7
    %v88 = vsub.s32 7, %v87
    %v89 = vrot.slane %v23, %v88
    %v91 = vsel %vm32, %v84, 0
    %v94 = vsel %vm32, %v85, 0
    %96 = vmatprep.subr.mxu0 0.0
    %97 = vmatpush1.msra.mxu0 %v24
    %98 = vmatprep.subr.mxu0 0.0
    %99 = vmatpush1.msra.mxu0 %v25
    %100 = vmatprep.subr.mxu0 0.0
    %101 = vmatpush1.msra.mxu0 %v26
    %102 = vmatprep.subr.mxu0 0.0
    %103 = vmatpush1.msra.mxu0 %v27
    %104 = vmatprep.subr.mxu0 0.0
    %105 = vmatpush1.msra.mxu0 0.0
    %106 = vmatprep.subr.mxu0 0.0
    %107 = vmatpush1.msra.mxu0 0.0
    %108 = vmatprep.subr.mxu0 0.0
    %109 = vmatpush1.msra.mxu0 0.0
    %110 = vmatprep.subr.mxu0 0.0
    %111 = vmatpush1.msra.mxu0 0.0
    %112 = vmatprep.subr.mxu0 0.0
    %113 = vmatpush1.msra.mxu0 0.0
    %114 = vmatprep.subr.mxu0 0.0
    %115 = vmatpush1.msra.mxu0 0.0
    %116 = vmatprep.subr.mxu0 0.0
    %117 = vmatpush1.msra.mxu0 0.0
    %118 = vmatprep.subr.mxu0 0.0
    %119 = vmatpush1.msra.mxu0 0.0
    %120 = vmatprep.subr.mxu0 0.0
    %121 = vmatpush1.msra.mxu0 0.0
    %122 = vmatprep.subr.mxu0 0.0
    %123 = vmatpush1.msra.mxu0 0.0
    %124 = vmatprep.subr.mxu0 0.0
    %125 = vmatpush1.msra.mxu0 0.0
    %126 = vmatprep.subr.mxu0 0.0
    %127 = vmatpush1.msra.mxu0 0.0
    %128 = vmatprep.subr.mxu0 0.0
    %129 = vmatpush1.msra.mxu0 0.0
    %130 = vmatprep.subr.mxu0 0.0
    %131 = vmatpush1.msra.mxu0 0.0
    %132 = vmatprep.subr.mxu0 0.0
    %133 = vmatpush1.msra.mxu0 0.0
    %134 = vmatprep.subr.mxu0 0.0
    %135 = vmatpush1.msra.mxu0 0.0
    %136 = vmatprep.subr.mxu0 0.0
    %137 = vmatpush1.msra.mxu0 0.0
    %138 = vmatprep.subr.mxu0 0.0
    %139 = vmatpush1.msra.mxu0 0.0
    %140 = vmatprep.subr.mxu0 0.0
    %141 = vmatpush1.msra.mxu0 0.0
    %142 = vmatprep.subr.mxu0 0.0
    %143 = vmatpush1.msra.mxu0 0.0
    %144 = vmatprep.subr.mxu0 0.0
    %145 = vmatpush1.msra.mxu0 0.0
    %146 = vmatprep.subr.mxu0 0.0
    %147 = vmatpush1.msra.mxu0 0.0
    %148 = vmatprep.subr.mxu0 0.0
    %149 = vmatpush1.msra.mxu0 0.0
    %150 = vmatprep.subr.mxu0 0.0
    %151 = vmatpush1.msra.mxu0 0.0
    %152 = vmatprep.subr.mxu0 0.0
    %153 = vmatpush1.msra.mxu0 0.0
    %154 = vmatprep.subr.mxu0 0.0
    %155 = vmatpush1.msra.mxu0 0.0
    %156 = vmatprep.subr.mxu0 0.0
    %157 = vmatpush1.msra.mxu0 0.0
    %158 = vmatprep.subr.mxu0 0.0
    %159 = vmatpush1.msra.mxu0 0.0
    %160 = vmatprep.mubr.f32.mxu0 0.0
    %161 = vmatmul.mubr.f32.gmra.mrb[0].mxu0 %v91
    %v162 = vpop.f32.mrb[0].mxu0
    %v163 = vadd.f32 %v89, %v162
    %v164 = vpop.f32.mrb[0].mxu0
    %165 = vmatprep.mubr.f32.mxu0 0.0
    %166 = vmatmul.mubr.f32.gmra.mrb[0].mxu0 %v94
    %v167 = vpop.f32.mrb[0].mxu0
    %v168 = vadd.f32 %v89, %v167
    %v169 = vpop.f32.mrb[0].mxu0
    %170 = vdwg.mxu0
    %v171 = vlaneseq
    %v172 = vshrl.u32 %v171, 7
    %v173 = vadd.s32 %v172, 8
    %v174 = vadd.s32 %v172, 16
    %v175 = vadd.s32 %v172, 24
    %v176 = vadd.s32 %v172, 32
    %v177 = vadd.s32 %v172, 40
    %v178 = vadd.s32 %v172, 48
    %v179 = vadd.s32 %v172, 56
    %v180 = vcvt.s32.f32 %v172
    %v181 = vcvt.s32.f32 %v173
    %v182 = vcvt.s32.f32 %v174
    %v183 = vcvt.s32.f32 %v175
    %v184 = vcvt.s32.f32 %v176
    %v185 = vcvt.s32.f32 %v177
    %v186 = vcvt.s32.f32 %v178
    %v187 = vcvt.s32.f32 %v179
    %v188 = vlaneseq
    %v189 = vand.u32 %v188, 127
    %v190 = vcvt.s32.f32 %v189
    %v191 = vmul.f32 %v180, 0.0625
    %v192 = vmul.f32 %v181, 0.0625
    %v193 = vmul.f32 %v182, 0.0625
    %v194 = vmul.f32 %v183, 0.0625
    %v195 = vmul.f32 %v184, 0.0625
    %v196 = vmul.f32 %v185, 0.0625
    %v197 = vmul.f32 %v186, 0.0625
    %v198 = vmul.f32 %v187, 0.0625
    %v199 = vfloor.f32 %v191
    %v200 = vfloor.f32 %v192
    %v201 = vfloor.f32 %v193
    %v202 = vfloor.f32 %v194
    %v203 = vfloor.f32 %v195
    %v204 = vfloor.f32 %v196
    %v205 = vfloor.f32 %v197
    %v206 = vfloor.f32 %v198
    %v207 = vmul.f32 %v190, 0.125
    %v208 = vfloor.f32 %v207
    %vm209 = vcmp.eq.f32.partialorder %v199, %v208
    %vm210 = vcmp.eq.f32.partialorder %v200, %v208
    %vm211 = vcmp.eq.f32.partialorder %v201, %v208
    %vm212 = vcmp.eq.f32.partialorder %v202, %v208
    %vm213 = vcmp.eq.f32.partialorder %v203, %v208
    %vm214 = vcmp.eq.f32.partialorder %v204, %v208
    %vm215 = vcmp.eq.f32.partialorder %v205, %v208
    %vm216 = vcmp.eq.f32.partialorder %v206, %v208
    %v217 = vsel %vm209, 1, 0
    %v218 = vsel %vm210, 1, 0
    %v219 = vsel %vm211, 1, 0
    %v220 = vsel %vm212, 1, 0
    %v221 = vsel %vm213, 1, 0
    %v222 = vsel %vm214, 1, 0
    %v223 = vsel %vm215, 1, 0
    %v224 = vsel %vm216, 1, 0
    %v225 = vcvt.s32.f32 %v217
    %v226 = vcvt.s32.f32 %v218
    %v227 = vcvt.s32.f32 %v219
    %v228 = vcvt.s32.f32 %v220
    %v229 = vcvt.s32.f32 %v221
    %v230 = vcvt.s32.f32 %v222
    %v231 = vcvt.s32.f32 %v223
    %v232 = vcvt.s32.f32 %v224
    %241 = vrot.lane.b32.xlu0 %v225, 32
    %v242 = vpop.permute.xlu0 %241
    %243 = vrot.lane.b32.xlu0 %v226, 32
    %v244 = vpop.permute.xlu0 %243
    %245 = vrot.lane.b32.xlu0 %v227, 32
    %v246 = vpop.permute.xlu0 %245
    %247 = vrot.lane.b32.xlu0 %v228, 32
    %v248 = vpop.permute.xlu0 %247
    %249 = vrot.lane.b32.xlu0 %v229, 32
    %v250 = vpop.permute.xlu0 %249
    %251 = vrot.lane.b32.xlu0 %v230, 32
    %v252 = vpop.permute.xlu0 %251
    %253 = vrot.lane.b32.xlu0 %v231, 32
    %v254 = vpop.permute.xlu0 %253
    %255 = vrot.lane.b32.xlu0 %v232, 32
    %v256 = vpop.permute.xlu0 %255
    %v265 = vmul.f32 %v163, %v242
    %v266 = vmul.f32 %v168, %v244
    %v267 = vmul.f32 %v163, %v246
    %v268 = vmul.f32 %v168, %v248
    %v269 = vmul.f32 %v163, %v250
    %v270 = vmul.f32 %v168, %v252
    %v271 = vmul.f32 %v163, %v254
    %v272 = vmul.f32 %v168, %v256
    %273 = vrot.lane.b32.xlu0 %v225, 64
    %v274 = vpop.permute.xlu0 %273
    %275 = vrot.lane.b32.xlu0 %v226, 64
    %v276 = vpop.permute.xlu0 %275
    %277 = vrot.lane.b32.xlu0 %v227, 64
    %v278 = vpop.permute.xlu0 %277
    %279 = vrot.lane.b32.xlu0 %v228, 64
    %v280 = vpop.permute.xlu0 %279
    %281 = vrot.lane.b32.xlu0 %v229, 64
    %v282 = vpop.permute.xlu0 %281
    %283 = vrot.lane.b32.xlu0 %v230, 64
    %v284 = vpop.permute.xlu0 %283
    %285 = vrot.lane.b32.xlu0 %v231, 64
    %v286 = vpop.permute.xlu0 %285
    %287 = vrot.lane.b32.xlu0 %v232, 64
    %v288 = vpop.permute.xlu0 %287
    %v297 = vmul.f32 %v163, %v274
    %v298 = vmul.f32 %v168, %v276
    %v299 = vmul.f32 %v163, %v278
    %v300 = vmul.f32 %v168, %v280
    %v301 = vmul.f32 %v163, %v282
    %v302 = vmul.f32 %v168, %v284
    %v303 = vmul.f32 %v163, %v286
    %v304 = vmul.f32 %v168, %v288
    %v305 = vld [vmem:[%s1] sm:$0xff]
    %v306 = vld [vmem:[%s1 + $0x8] sm:$0xff]
    %315 = vrot.lane.b32.xlu0 %v265, 96
    %v316 = vpop.permute.xlu0 %315
    %317 = vrot.lane.b32.xlu0 %v266, 96
    %v318 = vpop.permute.xlu0 %317
    %319 = vrot.lane.b32.xlu0 %v267, 96
    %v320 = vpop.permute.xlu0 %319
    %321 = vrot.lane.b32.xlu0 %v268, 96
    %v322 = vpop.permute.xlu0 %321
    %323 = vrot.lane.b32.xlu0 %v269, 96
    %v324 = vpop.permute.xlu0 %323
    %325 = vrot.lane.b32.xlu0 %v270, 96
    %v326 = vpop.permute.xlu0 %325
    %327 = vrot.lane.b32.xlu0 %v271, 96
    %v328 = vpop.permute.xlu0 %327
    %329 = vrot.lane.b32.xlu0 %v272, 96
    %v330 = vpop.permute.xlu0 %329
    %v332 = vsel %vm32, %v163, 0
    %v335 = vsel %vm32, %v168, 0
    %v337 = vsel %vm32, %v316, 0
    %v339 = vsel %vm32, %v318, 0
    %v341 = vsel %vm32, %v320, 0
    %v343 = vsel %vm32, %v322, 0
    %v345 = vsel %vm32, %v324, 0
    %v347 = vsel %vm32, %v326, 0
    %v349 = vsel %vm32, %v328, 0
    %v351 = vsel %vm32, %v330, 0
    %353 = vmatprep.subr.mxu0 0.0
    %354 = vmatpush1.xpose.msra.mxu0 %v337
    %355 = vmatprep.subr.mxu0 0.0
    %356 = vmatpush1.xpose.msra.mxu0 %v339
    %357 = vmatprep.subr.mxu0 0.0
    %358 = vmatpush1.xpose.msra.mxu0 %v341
    %359 = vmatprep.subr.mxu0 0.0
    %360 = vmatpush1.xpose.msra.mxu0 %v343
    %361 = vmatprep.subr.mxu0 0.0
    %362 = vmatpush1.xpose.msra.mxu0 %v345
    %363 = vmatprep.subr.mxu0 0.0
    %364 = vmatpush1.xpose.msra.mxu0 %v347
    %365 = vmatprep.subr.mxu0 0.0
    %366 = vmatpush1.xpose.msra.mxu0 %v349
    %367 = vmatprep.subr.mxu0 0.0
    %368 = vmatpush1.xpose.msra.mxu0 %v351
    %369 = vmatprep.subr.mxu0 0.0
    %370 = vmatpush1.xpose.msra.mxu0 0.0
    %371 = vmatprep.subr.mxu0 0.0
    %372 = vmatpush1.xpose.msra.mxu0 0.0
    %373 = vmatprep.subr.mxu0 0.0
    %374 = vmatpush1.xpose.msra.mxu0 0.0
    %375 = vmatprep.subr.mxu0 0.0
    %376 = vmatpush1.xpose.msra.mxu0 0.0
    %377 = vmatprep.subr.mxu0 0.0
    %378 = vmatpush1.xpose.msra.mxu0 0.0
    %379 = vmatprep.subr.mxu0 0.0
    %380 = vmatpush1.xpose.msra.mxu0 0.0
    %381 = vmatprep.subr.mxu0 0.0
    %382 = vmatpush1.xpose.msra.mxu0 0.0
    %383 = vmatprep.subr.mxu0 0.0
    %384 = vmatpush1.xpose.msra.mxu0 0.0
    %385 = vmatprep.subr.mxu0 0.0
    %386 = vmatpush1.xpose.msra.mxu0 0.0
    %387 = vmatprep.subr.mxu0 0.0
    %388 = vmatpush1.xpose.msra.mxu0 0.0
    %389 = vmatprep.subr.mxu0 0.0
    %390 = vmatpush1.xpose.msra.mxu0 0.0
    %391 = vmatprep.subr.mxu0 0.0
    %392 = vmatpush1.xpose.msra.mxu0 0.0
    %393 = vmatprep.subr.mxu0 0.0
    %394 = vmatpush1.xpose.msra.mxu0 0.0
    %395 = vmatprep.subr.mxu0 0.0
    %396 = vmatpush1.xpose.msra.mxu0 0.0
    %397 = vmatprep.subr.mxu0 0.0
    %398 = vmatpush1.xpose.msra.mxu0 0.0
    %399 = vmatprep.subr.mxu0 0.0
    %400 = vmatpush1.xpose.msra.mxu0 0.0
    %401 = vmatprep.subr.mxu0 0.0
    %402 = vmatpush1.xpose.msra.mxu0 0.0
    %403 = vmatprep.subr.mxu0 0.0
    %404 = vmatpush1.xpose.msra.mxu0 0.0
    %405 = vmatprep.subr.mxu0 0.0
    %406 = vmatpush1.xpose.msra.mxu0 0.0
    %407 = vmatprep.subr.mxu0 0.0
    %408 = vmatpush1.xpose.msra.mxu0 0.0
    %409 = vmatprep.subr.mxu0 0.0
    %410 = vmatpush1.xpose.msra.mxu0 0.0
    %411 = vmatprep.subr.mxu0 0.0
    %412 = vmatpush1.xpose.msra.mxu0 0.0
    %413 = vmatprep.subr.mxu0 0.0
    %414 = vmatpush1.xpose.msra.mxu0 0.0
    %415 = vmatprep.subr.mxu0 0.0
    %416 = vmatpush1.xpose.msra.mxu0 0.0
    %417 = vmatprep.mubr.f32.mxu0 0.0
    %418 = vmatmul.mubr.f32.gmra.mrb[0].mxu0 %v332
    %v419 = vpop.f32.mrb[0].mxu0
    %v420 = vadd.f32 %v305, %v419
    %v421 = vpop.f32.mrb[0].mxu0
    %422 = vmatprep.mubr.f32.mxu0 0.0
    %423 = vmatmul.mubr.f32.gmra.mrb[0].mxu0 %v335
    %v424 = vpop.f32.mrb[0].mxu0
    %v425 = vadd.f32 %v306, %v424
    %v426 = vpop.f32.mrb[0].mxu0
    %427 = vdwg.mxu0
    %vm428 = vcmask 523264
    %v429 = vsel %vm428, %v420, -inf
    %430 = vmax.xlane.f32.xlu0 %v429
    %v431 = vpop.xlane.xlu0 %430
    %v432 = vsel %vm428, %v425, -inf
    %433 = vmax.xlane.f32.xlu0 %v432
    %v434 = vpop.xlane.xlu0 %433
    %v435 = vsub.f32 %v420, %v431
    %v436 = vsub.f32 %v425, %v434
    %v437 = vmul.f32 %v435, 1.442695
    %v438 = vpow.pop %v437
    %v439 = vmul.f32 %v436, 1.442695
    %v440 = vpow.pop %v439
    %v441 = vmul.f32 %v190, 0.0625
    %v442 = vfloor.f32 %v441
    %vm443 = vcmp.eq.f32.partialorder %v199, %v442
    %vm444 = vcmp.eq.f32.partialorder %v200, %v442
    %vm445 = vcmp.eq.f32.partialorder %v201, %v442
    %vm446 = vcmp.eq.f32.partialorder %v202, %v442
    %vm447 = vcmp.eq.f32.partialorder %v203, %v442
    %vm448 = vcmp.eq.f32.partialorder %v204, %v442
    %vm449 = vcmp.eq.f32.partialorder %v205, %v442
    %vm450 = vcmp.eq.f32.partialorder %v206, %v442
    %v451 = vsel %vm443, 1, 0
    %v452 = vsel %vm444, 1, 0
    %v453 = vsel %vm445, 1, 0
    %v454 = vsel %vm446, 1, 0
    %v455 = vsel %vm447, 1, 0
    %v456 = vsel %vm448, 1, 0
    %v457 = vsel %vm449, 1, 0
    %v458 = vsel %vm450, 1, 0
    %v459 = vcvt.s32.f32 %v451
    %v460 = vcvt.s32.f32 %v452
    %v461 = vcvt.s32.f32 %v453
    %v462 = vcvt.s32.f32 %v454
    %v463 = vcvt.s32.f32 %v455
    %v464 = vcvt.s32.f32 %v456
    %v465 = vcvt.s32.f32 %v457
    %v466 = vcvt.s32.f32 %v458
    %v468 = vsel %vm428, %v438, 0
    %v471 = vsel %vm428, %v440, 0
    %473 = vmatprep.subr.mxu0 0.0
    %474 = vmatpush1.msra.mxu0 %v459
    %475 = vmatprep.subr.mxu0 0.0
    %476 = vmatpush1.msra.mxu0 %v460
    %477 = vmatprep.subr.mxu0 0.0
    %478 = vmatpush1.msra.mxu0 %v461
    %479 = vmatprep.subr.mxu0 0.0
    %480 = vmatpush1.msra.mxu0 %v462
    %481 = vmatprep.subr.mxu0 0.0
    %482 = vmatpush1.msra.mxu0 %v463
    %483 = vmatprep.subr.mxu0 0.0
    %484 = vmatpush1.msra.mxu0 %v464
    %485 = vmatprep.subr.mxu0 0.0
    %486 = vmatpush1.msra.mxu0 %v465
    %487 = vmatprep.subr.mxu0 0.0
    %488 = vmatpush1.msra.mxu0 %v466
    %489 = vmatprep.subr.mxu0 0.0
    %490 = vmatpush1.msra.mxu0 0.0
    %491 = vmatprep.subr.mxu0 0.0
    %492 = vmatpush1.msra.mxu0 0.0
    %493 = vmatprep.subr.mxu0 0.0
    %494 = vmatpush1.msra.mxu0 0.0
    %495 = vmatprep.subr.mxu0 0.0
    %496 = vmatpush1.msra.mxu0 0.0
    %497 = vmatprep.subr.mxu0 0.0
    %498 = vmatpush1.msra.mxu0 0.0
    %499 = vmatprep.subr.mxu0 0.0
    %500 = vmatpush1.msra.mxu0 0.0
    %501 = vmatprep.subr.mxu0 0.0
    %502 = vmatpush1.msra.mxu0 0.0
    %503 = vmatprep.subr.mxu0 0.0
    %504 = vmatpush1.msra.mxu0 0.0
    %505 = vmatprep.subr.mxu0 0.0
    %506 = vmatpush1.msra.mxu0 0.0
    %507 = vmatprep.subr.mxu0 0.0
    %508 = vmatpush1.msra.mxu0 0.0
    %509 = vmatprep.subr.mxu0 0.0
    %510 = vmatpush1.msra.mxu0 0.0
    %511 = vmatprep.subr.mxu0 0.0
    %512 = vmatpush1.msra.mxu0 0.0
    %513 = vmatprep.subr.mxu0 0.0
    %514 = vmatpush1.msra.mxu0 0.0
    %515 = vmatprep.subr.mxu0 0.0
    %516 = vmatpush1.msra.mxu0 0.0
    %517 = vmatprep.subr.mxu0 0.0
    %518 = vmatpush1.msra.mxu0 0.0
    %519 = vmatprep.subr.mxu0 0.0
    %520 = vmatpush1.msra.mxu0 0.0
    %521 = vmatprep.subr.mxu0 0.0
    %522 = vmatpush1.msra.mxu0 0.0
    %523 = vmatprep.subr.mxu0 0.0
    %524 = vmatpush1.msra.mxu0 0.0
    %525 = vmatprep.subr.mxu0 0.0
    %526 = vmatpush1.msra.mxu0 0.0
    %527 = vmatprep.subr.mxu0 0.0
    %528 = vmatpush1.msra.mxu0 0.0
    %529 = vmatprep.subr.mxu0 0.0
    %530 = vmatpush1.msra.mxu0 0.0
    %531 = vmatprep.subr.mxu0 0.0
    %532 = vmatpush1.msra.mxu0 0.0
    %533 = vmatprep.subr.mxu0 0.0
    %534 = vmatpush1.msra.mxu0 0.0
    %535 = vmatprep.subr.mxu0 0.0
    %536 = vmatpush1.msra.mxu0 0.0
    %537 = vmatprep.mubr.f32.mxu0 0.0
    %538 = vmatmul.mubr.f32.gmra.mrb[0].mxu0 %v468
    %v539 = vpop.f32.mrb[0].mxu0
    %v540 = vadd.f32 0.0, %v539
    %v541 = vpop.f32.mrb[0].mxu0
    %542 = vmatprep.mubr.f32.mxu0 0.0
    %543 = vmatmul.mubr.f32.gmra.mrb[0].mxu0 %v471
    %v544 = vpop.f32.mrb[0].mxu0
    %v545 = vadd.f32 0.0, %v544
    %v546 = vpop.f32.mrb[0].mxu0
    %547 = vdwg.mxu0
    %v548 = vmax.f32 %v540, 1e-30
    %v549 = vmax.f32 %v545, 1e-30
    %v550 = vrcp.pop %v548
    %v551 = vrcp.pop %v549
    %v552 = vmul.f32 %v438, %v550
    %v553 = vmul.f32 %v440, %v551
    %562 = vrot.lane.b32.xlu0 %v297, 64
    %v563 = vpop.permute.xlu0 %562
    %564 = vrot.lane.b32.xlu0 %v298, 64
    %v565 = vpop.permute.xlu0 %564
    %566 = vrot.lane.b32.xlu0 %v299, 64
    %v567 = vpop.permute.xlu0 %566
    %568 = vrot.lane.b32.xlu0 %v300, 64
    %v569 = vpop.permute.xlu0 %568
    %570 = vrot.lane.b32.xlu0 %v301, 64
    %v571 = vpop.permute.xlu0 %570
    %572 = vrot.lane.b32.xlu0 %v302, 64
    %v573 = vpop.permute.xlu0 %572
    %574 = vrot.lane.b32.xlu0 %v303, 64
    %v575 = vpop.permute.xlu0 %574
    %576 = vrot.lane.b32.xlu0 %v304, 64
    %v577 = vpop.permute.xlu0 %576
    %v587 = vsel %vm428, %v552, 0
    %v590 = vsel %vm428, %v553, 0
    %592 = vmatprep.subr.mxu0 0.0
    %593 = vmatpush1.msra.mxu0 %v563
    %594 = vmatprep.subr.mxu0 0.0
    %595 = vmatpush1.msra.mxu0 %v565
    %596 = vmatprep.subr.mxu0 0.0
    %597 = vmatpush1.msra.mxu0 %v567
    %598 = vmatprep.subr.mxu0 0.0
    %599 = vmatpush1.msra.mxu0 %v569
    %600 = vmatprep.subr.mxu0 0.0
    %601 = vmatpush1.msra.mxu0 %v571
    %602 = vmatprep.subr.mxu0 0.0
    %603 = vmatpush1.msra.mxu0 %v573
    %604 = vmatprep.subr.mxu0 0.0
    %605 = vmatpush1.msra.mxu0 %v575
    %606 = vmatprep.subr.mxu0 0.0
    %607 = vmatpush1.msra.mxu0 %v577
    %608 = vmatprep.subr.mxu0 0.0
    %609 = vmatpush1.msra.mxu0 0.0
    %610 = vmatprep.subr.mxu0 0.0
    %611 = vmatpush1.msra.mxu0 0.0
    %612 = vmatprep.subr.mxu0 0.0
    %613 = vmatpush1.msra.mxu0 0.0
    %614 = vmatprep.subr.mxu0 0.0
    %615 = vmatpush1.msra.mxu0 0.0
    %616 = vmatprep.subr.mxu0 0.0
    %617 = vmatpush1.msra.mxu0 0.0
    %618 = vmatprep.subr.mxu0 0.0
    %619 = vmatpush1.msra.mxu0 0.0
    %620 = vmatprep.subr.mxu0 0.0
    %621 = vmatpush1.msra.mxu0 0.0
    %622 = vmatprep.subr.mxu0 0.0
    %623 = vmatpush1.msra.mxu0 0.0
    %624 = vmatprep.subr.mxu0 0.0
    %625 = vmatpush1.msra.mxu0 0.0
    %626 = vmatprep.subr.mxu0 0.0
    %627 = vmatpush1.msra.mxu0 0.0
    %628 = vmatprep.subr.mxu0 0.0
    %629 = vmatpush1.msra.mxu0 0.0
    %630 = vmatprep.subr.mxu0 0.0
    %631 = vmatpush1.msra.mxu0 0.0
    %632 = vmatprep.subr.mxu0 0.0
    %633 = vmatpush1.msra.mxu0 0.0
    %634 = vmatprep.subr.mxu0 0.0
    %635 = vmatpush1.msra.mxu0 0.0
    %636 = vmatprep.subr.mxu0 0.0
    %637 = vmatpush1.msra.mxu0 0.0
    %638 = vmatprep.subr.mxu0 0.0
    %639 = vmatpush1.msra.mxu0 0.0
    %640 = vmatprep.subr.mxu0 0.0
    %641 = vmatpush1.msra.mxu0 0.0
    %642 = vmatprep.subr.mxu0 0.0
    %643 = vmatpush1.msra.mxu0 0.0
    %644 = vmatprep.subr.mxu0 0.0
    %645 = vmatpush1.msra.mxu0 0.0
    %646 = vmatprep.subr.mxu0 0.0
    %647 = vmatpush1.msra.mxu0 0.0
    %648 = vmatprep.subr.mxu0 0.0
    %649 = vmatpush1.msra.mxu0 0.0
    %650 = vmatprep.subr.mxu0 0.0
    %651 = vmatpush1.msra.mxu0 0.0
    %652 = vmatprep.subr.mxu0 0.0
    %653 = vmatpush1.msra.mxu0 0.0
    %654 = vmatprep.subr.mxu0 0.0
    %655 = vmatpush1.msra.mxu0 0.0
    %656 = vmatprep.mubr.f32.mxu0 0.0
    %657 = vmatmul.mubr.f32.gmra.mrb[0].mxu0 %v587
    %v658 = vpop.f32.mrb[0].mxu0
    %v659 = vadd.f32 0.0, %v658
    %v660 = vpop.f32.mrb[0].mxu0
    %661 = vmatprep.mubr.f32.mxu0 0.0
    %662 = vmatmul.mubr.f32.gmra.mrb[0].mxu0 %v590
    %v663 = vpop.f32.mrb[0].mxu0
    %v664 = vadd.f32 0.0, %v663
    %v665 = vpop.f32.mrb[0].mxu0
    %666 = vdwg.mxu0
    %671 = vrot.lane.b32.xlu0 %v24, 32
    %v672 = vpop.permute.xlu0 %671
    %673 = vrot.lane.b32.xlu0 %v25, 32
    %v674 = vpop.permute.xlu0 %673
    %675 = vrot.lane.b32.xlu0 %v26, 32
    %v676 = vpop.permute.xlu0 %675
    %677 = vrot.lane.b32.xlu0 %v27, 32
    %v678 = vpop.permute.xlu0 %677
    %v684 = vsel %vm32, %v659, 0
    %v687 = vsel %vm32, %v664, 0
    %689 = vmatprep.subr.mxu0 0.0
    %690 = vmatpush1.msra.mxu0 %v672
    %691 = vmatprep.subr.mxu0 0.0
    %692 = vmatpush1.msra.mxu0 %v674
    %693 = vmatprep.subr.mxu0 0.0
    %694 = vmatpush1.msra.mxu0 %v676
    %695 = vmatprep.subr.mxu0 0.0
    %696 = vmatpush1.msra.mxu0 %v678
    %697 = vmatprep.subr.mxu0 0.0
    %698 = vmatpush1.msra.mxu0 0.0
    %699 = vmatprep.subr.mxu0 0.0
    %700 = vmatpush1.msra.mxu0 0.0
    %701 = vmatprep.subr.mxu0 0.0
    %702 = vmatpush1.msra.mxu0 0.0
    %703 = vmatprep.subr.mxu0 0.0
    %704 = vmatpush1.msra.mxu0 0.0
    %705 = vmatprep.subr.mxu0 0.0
    %706 = vmatpush1.msra.mxu0 0.0
    %707 = vmatprep.subr.mxu0 0.0
    %708 = vmatpush1.msra.mxu0 0.0
    %709 = vmatprep.subr.mxu0 0.0
    %710 = vmatpush1.msra.mxu0 0.0
    %711 = vmatprep.subr.mxu0 0.0
    %712 = vmatpush1.msra.mxu0 0.0
    %713 = vmatprep.subr.mxu0 0.0
    %714 = vmatpush1.msra.mxu0 0.0
    %715 = vmatprep.subr.mxu0 0.0
    %716 = vmatpush1.msra.mxu0 0.0
    %717 = vmatprep.subr.mxu0 0.0
    %718 = vmatpush1.msra.mxu0 0.0
    %719 = vmatprep.subr.mxu0 0.0
    %720 = vmatpush1.msra.mxu0 0.0
    %721 = vmatprep.subr.mxu0 0.0
    %722 = vmatpush1.msra.mxu0 0.0
    %723 = vmatprep.subr.mxu0 0.0
    %724 = vmatpush1.msra.mxu0 0.0
    %725 = vmatprep.subr.mxu0 0.0
    %726 = vmatpush1.msra.mxu0 0.0
    %727 = vmatprep.subr.mxu0 0.0
    %728 = vmatpush1.msra.mxu0 0.0
    %729 = vmatprep.subr.mxu0 0.0
    %730 = vmatpush1.msra.mxu0 0.0
    %731 = vmatprep.subr.mxu0 0.0
    %732 = vmatpush1.msra.mxu0 0.0
    %733 = vmatprep.subr.mxu0 0.0
    %734 = vmatpush1.msra.mxu0 0.0
    %735 = vmatprep.subr.mxu0 0.0
    %736 = vmatpush1.msra.mxu0 0.0
    %737 = vmatprep.subr.mxu0 0.0
    %738 = vmatpush1.msra.mxu0 0.0
    %739 = vmatprep.subr.mxu0 0.0
    %740 = vmatpush1.msra.mxu0 0.0
    %741 = vmatprep.subr.mxu0 0.0
    %742 = vmatpush1.msra.mxu0 0.0
    %743 = vmatprep.subr.mxu0 0.0
    %744 = vmatpush1.msra.mxu0 0.0
    %745 = vmatprep.subr.mxu0 0.0
    %746 = vmatpush1.msra.mxu0 0.0
    %747 = vmatprep.subr.mxu0 0.0
    %748 = vmatpush1.msra.mxu0 0.0
    %749 = vmatprep.subr.mxu0 0.0
    %750 = vmatpush1.msra.mxu0 0.0
    %751 = vmatprep.subr.mxu0 0.0
    %752 = vmatpush1.msra.mxu0 0.0
    %753 = vmatprep.mubr.f32.mxu0 0.0
    %754 = vmatmul.mubr.f32.gmra.mrb[0].mxu0 %v684
    %v755 = vpop.f32.mrb[0].mxu0
    %v756 = vadd.f32 0.0, %v755
    %v757 = vpop.f32.mrb[0].mxu0
    %758 = vmatprep.mubr.f32.mxu0 0.0
    %759 = vmatmul.mubr.f32.gmra.mrb[0].mxu0 %v687
    %v760 = vpop.f32.mrb[0].mxu0
    %v761 = vadd.f32 0.0, %v760
    %v762 = vpop.f32.mrb[0].mxu0
    %763 = vdwg.mxu0
    %v764 = vadd.f32 %v21, %v756
    %v765 = vadd.f32 %v22, %v761
    %v766 = vlaneseq
    %v767 = vshrl.u32 %v766, 7
    %v768 = vsub.s32 4, %v767
    %v769 = vrot.slane %v23, %v768
    %v770 = vadd.f32 %v764, %v769
    %v771 = vadd.f32 %v765, %v769
    %v772 = vsel %vm32, %v770, 0.0
    %773 = vadd.xlane.f32.xlu0 %v772
    %v774 = vpop.xlane.xlu0 %773
    %v775 = vsel %vm32, %v771, 0.0
    %776 = vadd.xlane.f32.xlu0 %v775
    %v777 = vpop.xlane.xlu0 %776
    %v778 = vmul.f32 %v774, %v39
    %v779 = vmul.f32 %v777, %v39
    %v780 = vsub.f32 %v770, %v778
    %v781 = vsub.f32 %v771, %v779
    %v782 = vmul.f32 %v780, %v780
    %v783 = vmul.f32 %v781, %v781
    %v784 = vsel %vm32, %v782, 0.0
    %785 = vadd.xlane.f32.xlu0 %v784
    %v786 = vpop.xlane.xlu0 %785
    %v787 = vsel %vm32, %v783, 0.0
    %788 = vadd.xlane.f32.xlu0 %v787
    %v789 = vpop.xlane.xlu0 %788
    %v790 = vmul.f32 %v786, 0.032258064
    %v791 = vmul.f32 %v789, 0.032258064
    %v792 = vrsqrt.pop %v790
    %v793 = vmul.f32 %v790, %v792
    %vm794 = vcmp.eq.f32.partialorder %v790, inf
    %v795 = vsel %vm794, %v790, %v793
    %vm796 = vcmp.eq.f32.partialorder %v790, 0.0
    %v797 = vand.u32 %v790, 2147483648
    %v798 = vsel %vm796, %v797, %v795
    %v799 = vrsqrt.pop %v791
    %v800 = vmul.f32 %v791, %v799
    %vm801 = vcmp.eq.f32.partialorder %v791, inf
    %v802 = vsel %vm801, %v791, %v800
    %vm803 = vcmp.eq.f32.partialorder %v791, 0.0
    %v804 = vand.u32 %v791, 2147483648
    %v805 = vsel %vm803, %v804, %v802
    %v806 = vadd.f32 %v798, 1e-06
    %v807 = vadd.f32 %v805, 1e-06
    %v808 = vrcp.pop %v806
    %v809 = vrcp.pop %v807
    %v810 = vlaneseq
    %v811 = vshrl.u32 %v810, 7
    %v812 = vsub.s32 2, %v811
    %v813 = vrot.slane %v23, %v812
    %v814 = vmul.f32 %v813, %v780
    %v815 = vmul.f32 %v813, %v781
    %v816 = vmul.f32 %v814, %v808
    %v817 = vmul.f32 %v815, %v809
    %v818 = vlaneseq
    %v819 = vshrl.u32 %v818, 7
    %v820 = vsub.s32 3, %v819
    %v821 = vrot.slane %v23, %v820
    %v822 = vadd.f32 %v816, %v821
    %v823 = vadd.f32 %v817, %v821
    %v824 = vlaneseq
    %v825 = vshrl.u32 %v824, 7
    %v826 = vsub.s32 6, %v825
    %v827 = vrot.slane %v23, %v826
    %v829 = vsel %vm32, %v822, 0
    %v832 = vsel %vm32, %v823, 0
    %834 = vmatprep.subr.mxu0 0.0
    %835 = vmatpush1.msra.mxu0 %v28
    %836 = vmatprep.subr.mxu0 0.0
    %837 = vmatpush1.msra.mxu0 %v29
    %838 = vmatprep.subr.mxu0 0.0
    %839 = vmatpush1.msra.mxu0 %v30
    %840 = vmatprep.subr.mxu0 0.0
    %841 = vmatpush1.msra.mxu0 %v31
    %842 = vmatprep.subr.mxu0 0.0
    %843 = vmatpush1.msra.mxu0 0.0
    %844 = vmatprep.subr.mxu0 0.0
    %845 = vmatpush1.msra.mxu0 0.0
    %846 = vmatprep.subr.mxu0 0.0
    %847 = vmatpush1.msra.mxu0 0.0
    %848 = vmatprep.subr.mxu0 0.0
    %849 = vmatpush1.msra.mxu0 0.0
    %850 = vmatprep.subr.mxu0 0.0
    %851 = vmatpush1.msra.mxu0 0.0
    %852 = vmatprep.subr.mxu0 0.0
    %853 = vmatpush1.msra.mxu0 0.0
    %854 = vmatprep.subr.mxu0 0.0
    %855 = vmatpush1.msra.mxu0 0.0
    %856 = vmatprep.subr.mxu0 0.0
    %857 = vmatpush1.msra.mxu0 0.0
    %858 = vmatprep.subr.mxu0 0.0
    %859 = vmatpush1.msra.mxu0 0.0
    %860 = vmatprep.subr.mxu0 0.0
    %861 = vmatpush1.msra.mxu0 0.0
    %862 = vmatprep.subr.mxu0 0.0
    %863 = vmatpush1.msra.mxu0 0.0
    %864 = vmatprep.subr.mxu0 0.0
    %865 = vmatpush1.msra.mxu0 0.0
    %866 = vmatprep.subr.mxu0 0.0
    %867 = vmatpush1.msra.mxu0 0.0
    %868 = vmatprep.subr.mxu0 0.0
    %869 = vmatpush1.msra.mxu0 0.0
    %870 = vmatprep.subr.mxu0 0.0
    %871 = vmatpush1.msra.mxu0 0.0
    %872 = vmatprep.subr.mxu0 0.0
    %873 = vmatpush1.msra.mxu0 0.0
    %874 = vmatprep.subr.mxu0 0.0
    %875 = vmatpush1.msra.mxu0 0.0
    %876 = vmatprep.subr.mxu0 0.0
    %877 = vmatpush1.msra.mxu0 0.0
    %878 = vmatprep.subr.mxu0 0.0
    %879 = vmatpush1.msra.mxu0 0.0
    %880 = vmatprep.subr.mxu0 0.0
    %881 = vmatpush1.msra.mxu0 0.0
    %882 = vmatprep.subr.mxu0 0.0
    %883 = vmatpush1.msra.mxu0 0.0
    %884 = vmatprep.subr.mxu0 0.0
    %885 = vmatpush1.msra.mxu0 0.0
    %886 = vmatprep.subr.mxu0 0.0
    %887 = vmatpush1.msra.mxu0 0.0
    %888 = vmatprep.subr.mxu0 0.0
    %889 = vmatpush1.msra.mxu0 0.0
    %890 = vmatprep.subr.mxu0 0.0
    %891 = vmatpush1.msra.mxu0 0.0
    %892 = vmatprep.subr.mxu0 0.0
    %893 = vmatpush1.msra.mxu0 0.0
    %894 = vmatprep.subr.mxu0 0.0
    %895 = vmatpush1.msra.mxu0 0.0
    %896 = vmatprep.subr.mxu0 0.0
    %897 = vmatpush1.msra.mxu0 0.0
    %898 = vmatprep.mubr.f32.mxu0 0.0
    %899 = vmatmul.mubr.f32.gmra.mrb[0].mxu0 %v829
    %v900 = vpop.f32.mrb[0].mxu0
    %v901 = vadd.f32 %v827, %v900
    %v902 = vpop.f32.mrb[0].mxu0
    %903 = vmatprep.mubr.f32.mxu0 0.0
    %904 = vmatmul.mubr.f32.gmra.mrb[0].mxu0 %v832
    %v905 = vpop.f32.mrb[0].mxu0
    %v906 = vadd.f32 %v827, %v905
    %v907 = vpop.f32.mrb[0].mxu0
    %908 = vdwg.mxu0
    %v909 = vmax.f32 %v901, 0.0
    %v910 = vmax.f32 %v906, 0.0
    %v911 = vld [vmem:[%s3] sm:$0xff]
    %v912 = vld [vmem:[%s3 + $0x8] sm:$0xff]
    %v913 = vld [vmem:[%s3 + $0x10] sm:$0xff]
    %v914 = vld [vmem:[%s3 + $0x18] sm:$0xff]
    %v915 = vld [vmem:[%s3 + $0x20] sm:$0xff]
    %v916 = vld [vmem:[%s3 + $0x28] sm:$0xff]
    %v917 = vld [vmem:[%s3 + $0x30] sm:$0xff]
    %v918 = vld [vmem:[%s3 + $0x38] sm:$0xff]
    %v919 = vlaneseq
    %v920 = vshrl.u32 %v919, 7
    %v921 = vsub.s32 5, %v920
    %v922 = vrot.slane %v23, %v921
    %v924 = vsel %vm428, %v909, 0
    %v927 = vsel %vm428, %v910, 0
    %929 = vmatprep.subr.mxu0 0.0
    %930 = vmatpush1.msra.mxu0 %v911
    %931 = vmatprep.subr.mxu0 0.0
    %932 = vmatpush1.msra.mxu0 %v912
    %933 = vmatprep.subr.mxu0 0.0
    %934 = vmatpush1.msra.mxu0 %v913
    %935 = vmatprep.subr.mxu0 0.0
    %936 = vmatpush1.msra.mxu0 %v914
    %937 = vmatprep.subr.mxu0 0.0
    %938 = vmatpush1.msra.mxu0 %v915
    %939 = vmatprep.subr.mxu0 0.0
    %940 = vmatpush1.msra.mxu0 %v916
    %941 = vmatprep.subr.mxu0 0.0
    %942 = vmatpush1.msra.mxu0 %v917
    %943 = vmatprep.subr.mxu0 0.0
    %944 = vmatpush1.msra.mxu0 %v918
    %945 = vmatprep.subr.mxu0 0.0
    %946 = vmatpush1.msra.mxu0 0.0
    %947 = vmatprep.subr.mxu0 0.0
    %948 = vmatpush1.msra.mxu0 0.0
    %949 = vmatprep.subr.mxu0 0.0
    %950 = vmatpush1.msra.mxu0 0.0
    %951 = vmatprep.subr.mxu0 0.0
    %952 = vmatpush1.msra.mxu0 0.0
    %953 = vmatprep.subr.mxu0 0.0
    %954 = vmatpush1.msra.mxu0 0.0
    %955 = vmatprep.subr.mxu0 0.0
    %956 = vmatpush1.msra.mxu0 0.0
    %957 = vmatprep.subr.mxu0 0.0
    %958 = vmatpush1.msra.mxu0 0.0
    %959 = vmatprep.subr.mxu0 0.0
    %960 = vmatpush1.msra.mxu0 0.0
    %961 = vmatprep.subr.mxu0 0.0
    %962 = vmatpush1.msra.mxu0 0.0
    %963 = vmatprep.subr.mxu0 0.0
    %964 = vmatpush1.msra.mxu0 0.0
    %965 = vmatprep.subr.mxu0 0.0
    %966 = vmatpush1.msra.mxu0 0.0
    %967 = vmatprep.subr.mxu0 0.0
    %968 = vmatpush1.msra.mxu0 0.0
    %969 = vmatprep.subr.mxu0 0.0
    %970 = vmatpush1.msra.mxu0 0.0
    %971 = vmatprep.subr.mxu0 0.0
    %972 = vmatpush1.msra.mxu0 0.0
    %973 = vmatprep.subr.mxu0 0.0
    %974 = vmatpush1.msra.mxu0 0.0
    %975 = vmatprep.subr.mxu0 0.0
    %976 = vmatpush1.msra.mxu0 0.0
    %977 = vmatprep.subr.mxu0 0.0
    %978 = vmatpush1.msra.mxu0 0.0
    %979 = vmatprep.subr.mxu0 0.0
    %980 = vmatpush1.msra.mxu0 0.0
    %981 = vmatprep.subr.mxu0 0.0
    %982 = vmatpush1.msra.mxu0 0.0
    %983 = vmatprep.subr.mxu0 0.0
    %984 = vmatpush1.msra.mxu0 0.0
    %985 = vmatprep.subr.mxu0 0.0
    %986 = vmatpush1.msra.mxu0 0.0
    %987 = vmatprep.subr.mxu0 0.0
    %988 = vmatpush1.msra.mxu0 0.0
    %989 = vmatprep.subr.mxu0 0.0
    %990 = vmatpush1.msra.mxu0 0.0
    %991 = vmatprep.subr.mxu0 0.0
    %992 = vmatpush1.msra.mxu0 0.0
    %993 = vmatprep.mubr.f32.mxu0 0.0
    %994 = vmatmul.mubr.f32.gmra.mrb[0].mxu0 %v924
    %v995 = vpop.f32.mrb[0].mxu0
    %v996 = vadd.f32 %v922, %v995
    %v997 = vpop.f32.mrb[0].mxu0
    %998 = vmatprep.mubr.f32.mxu0 0.0
    %999 = vmatmul.mubr.f32.gmra.mrb[0].mxu0 %v927
    %v1000 = vpop.f32.mrb[0].mxu0
    %v1001 = vadd.f32 %v922, %v1000
    %v1002 = vpop.f32.mrb[0].mxu0
    %1003 = vdwg.mxu0
    %v1004 = vadd.f32 %v770, %v996
    %v1005 = vadd.f32 %v771, %v1001
    %1006 = vst.msk [vmem:[#allocation2] sm:$0xff] %vm32, %v1004
    %1007 = vst.msk [vmem:[#allocation2 + $0x8] sm:$0xff] %vm32, %v1005
    // Predicated region
    $region22: #{encoder_layer.1} parent=1 // pred_check
      _
    $region23: #{encoder_layer.1} parent=1 // pred_check_branch
      %1009 = sbr.rel (0) target = $region25
    $region24: #{encoder_layer.1} parent=1 // pred_region
      %s1011 = ssub.s32 256, 256
      %1012 = vsyncadd [#allocation3], %s1011
      %s1013 = sshll.u32 [#allocation2], 4
      %s1014 = int_to_ptr.vmem [resolvable:$true] %s1013
      %1019 = dma.vmem_to_hbm [thread:$0]  %s1014, 256, %s5, [#allocation3], 128, 128, 8
    $region25: #{encoder_layer.1} parent=1 // pred_fallthru
      _
    // Predicated region
    $region26: #{encoder_layer.1} parent=1 // pred_check
      _
    $region27: #{encoder_layer.1} parent=1 // pred_check_branch
      %1021 = sbr.rel (0) target = $region29
    $region28: #{encoder_layer.1} parent=1 // pred_region
      %1022 = dma.done [#allocation3], 256
    $region29: #{encoder_layer.1} parent=1 // pred_fallthru
      _
    %1023 = vsyncpa [#allocation3], 1

</llo_original>
